<compile_context>
chip_gen: v7x
topology: tpu7x:2x2x1
jax: 0.10.0
libtpu: 0.0.40
codegen_flags: <defaults>
</compile_context>

<pallas_src>
from functools import partial

import jax
import jax.numpy as jnp
from jax.experimental import pallas as pl
from jax.experimental.pallas import tpu as pltpu


def _round_up(n, m):
    return -(-n // m) * m


def prepare_params(w_i2h, b_i2h, w_i2o, b_i2o, input_size, *,
                   param_dtype=jnp.float32, lane_multiple=128):
    """One-time parameter preparation (hoisted out of the per-step path).

    PyTorch layouts: w_i2h (H, I+H), w_i2o (O, I+H), biases (H,), (O,).
    Produces (all already transposed / fused / padded):
      wx   (I, P)  rows of the fused transposed weight multiplying the input
      wh   (P, P)  rows multiplying the FULL packed hidden slab (rows >= H are
                   zero so the log-prob / pad lanes of the carry contribute 0)
      bias (1, P)  fused bias (always f32)
    with P = H+O rounded up to `lane_multiple` (128; use 256 on v6e/v7x once
    H+O > 128).  param_dtype=bf16 halves weight traffic on every generation
    (MXU accumulation stays f32 in-kernel)."""
    H = w_i2h.shape[0]
    O = w_i2o.shape[0]
    I = input_size
    P = max(lane_multiple, _round_up(H + O, lane_multiple))

    w_fused = jnp.concatenate([w_i2h.T, w_i2o.T], axis=1)            # (I+H, H+O)
    w_fused = jnp.pad(w_fused, ((0, 0), (0, P - (H + O))))           # (I+H, P)
    wx = w_fused[:I].astype(param_dtype)                             # (I, P)
    wh = jnp.pad(w_fused[I:], ((0, P - H), (0, 0))).astype(param_dtype)  # (P, P)
    bias = jnp.concatenate([b_i2h, b_i2o])
    bias = jnp.pad(bias, (0, P - (H + O))).reshape(1, P).astype(jnp.float32)
    return wx, wh, bias, H, O


def _pack_outputs(y, is_logit, is_hidden):
    """y: (B, P) fused pre-activations; cols [0:H]=new hidden, [H:H+O]=logits.

    Returns the packed slab [new_hidden | log_softmax(logits) | zeros].
    Logit lanes are masked to -inf BEFORE exp so hidden lanes never overflow."""
    y_logits = jnp.where(is_logit, y, -jnp.inf)
    m = jnp.max(y_logits, axis=-1, keepdims=True)
    shifted = y_logits - m
    denom = jnp.sum(jnp.exp(shifted), axis=-1, keepdims=True)   # exp(-inf)=0
    log_probs = shifted - jnp.log(denom)
    return jnp.where(is_logit, log_probs, jnp.where(is_hidden, y, 0.0))


def _rnn_seq_kernel(x_ref, h0_ref, wx_ref, wh_ref, b_ref, out_ref, h_scratch,
                    *, H, O, Tb, B_pad, unroll):
    """One TIME BLOCK of the recurrence (grid axis 0 = time blocks).

    Phase 1: hoisted input projection, one (Tb*B_pad, I)x(I, P) matmul staged
             directly into out_ref.
    Phase 2: serial fori_loop over the Tb steps; the hidden carry is the full
             packed (B_pad, P) slab (no lane slicing), persisted across grid
             steps in a VMEM scratch."""
    P = out_ref.shape[-1]

    @pl.when(pl.program_id(0) == 0)
    def _():
        h_scratch[...] = h0_ref[...]

    # ---- Phase 1: time-independent x-projection (+ bias), one big matmul ----
    wx = wx_ref[...]
    out_ref[...] = (jnp.dot(x_ref[...].astype(wx.dtype), wx,
                            preferred_element_type=jnp.float32)
                    + b_ref[...])

    # ---- Hoisted loop invariants ----
    wh = wh_ref[...]
    lane = jax.lax.broadcasted_iota(jnp.int32, (B_pad, P), 1)
    is_logit = (lane >= H) & (lane < H + O)
    is_hidden = lane < H

    # ---- Phase 2: serial recurrence over the block ----
    def step(t, h):
        row = pl.multiple_of(t * B_pad, B_pad)
        y = (jnp.dot(h.astype(wh.dtype), wh,
                     preferred_element_type=jnp.float32)
             + out_ref[pl.ds(row, B_pad), :])
        packed = _pack_outputs(y, is_logit, is_hidden)
        out_ref[pl.ds(row, B_pad), :] = packed        # lane-dense unmasked vst
        return packed

    h_final = jax.lax.fori_loop(0, Tb, step, h_scratch[...], unroll=unroll)
    h_scratch[...] = h_final


def rnn_forward_sequence(x_seq, hidden, params, *, max_time_block=32):
    """Roll the RNN cell over time inside ONE pallas_call.

    x_seq: (T, B, I), hidden: (B, H).
    Returns (log_probs_seq (T, B, O), final_hidden (B, H))."""
    wx, wh, bias, H, O = params
    T, B, I = x_seq.shape
    P = wx.shape[1]

    B_pad = max(8, _round_up(B, 8))            # >=8 sublanes (f32)
    Tb = min(T, max_time_block)                # steps per grid step
    n_blocks = -(-T // Tb)
    T_pad = n_blocks * Tb

    # Pad batch/time and flatten time into the sublane (M) axis so the kernel
    # sees plain 2-D slabs (no in-kernel reshape).
    x_p = jnp.zeros((T_pad, B_pad, I), jnp.float32)
    x_p = x_p.at[:T, :B].set(x_seq.astype(jnp.float32))
    x2d = x_p.reshape(T_pad * B_pad, I)
    h0 = jnp.zeros((B_pad, P), jnp.float32)
    h0 = h0.at[:B, :H].set(hidden.astype(jnp.float32))

    packed = pl.pallas_call(
        partial(_rnn_seq_kernel, H=H, O=O, Tb=Tb, B_pad=B_pad,
                unroll=(Tb <= 16)),
        out_shape=jax.ShapeDtypeStruct((T_pad * B_pad, P), jnp.float32),
        grid=(n_blocks,),
        in_specs=[
            pl.BlockSpec((Tb * B_pad, I), lambda tb: (tb, 0)),  # x block
            pl.BlockSpec((B_pad, P), lambda tb: (0, 0)),        # h0 (read @0)
            pl.BlockSpec((I, P), lambda tb: (0, 0)),            # Wx resident
            pl.BlockSpec((P, P), lambda tb: (0, 0)),            # Wh resident
            pl.BlockSpec((1, P), lambda tb: (0, 0)),            # bias resident
        ],
        out_specs=pl.BlockSpec((Tb * B_pad, P), lambda tb: (tb, 0)),
        scratch_shapes=[pltpu.VMEM((B_pad, P), jnp.float32)],    # hidden carry
        compiler_params=pltpu.CompilerParams(
            dimension_semantics=("arbitrary",)),                 # time serial
    )(x2d, h0, wx, wh, bias)

    packed = packed.reshape(T_pad, B_pad, P)
    log_probs_seq = packed[:T, :B, H:H + O]
    final_hidden = packed[T - 1, :B, :H]     # valid even when T was padded
    return log_probs_seq, final_hidden


def rnn_forward(x, hidden, params):
    """Single step: equivalent of RNN.forward(input, hidden).

    NOTE: for multi-step rollouts prefer rnn_forward_sequence — one pallas_call
    per step pays multi-us launch + HBM<->VMEM staging every step."""
    log_probs_seq, new_hidden = rnn_forward_sequence(x[None], hidden, params)
    return log_probs_seq[0], new_hidden


def init_hidden(batch, hidden_size):
    return jnp.zeros((batch, hidden_size), dtype=jnp.float32)


if __name__ == "__main__":
    batch = 2
    input_size = 16
    hidden_size = 32
    output_size = 8
    seq_len = 8

    key = jax.random.PRNGKey(0)
    k_x, k_seq, k_wh, k_bh, k_wo, k_bo = jax.random.split(key, 6)

    x = jax.random.normal(k_x, (batch, input_size), dtype=jnp.float32)
    x_seq = jax.random.normal(k_seq, (seq_len, batch, input_size),
                              dtype=jnp.float32)
    h0 = init_hidden(batch, hidden_size)

    # PyTorch Linear-style parameters: (out, in) weights, (out,) biases.
    fan_in = input_size + hidden_size
    bound = 1.0 / (fan_in ** 0.5)
    w_i2h = jax.random.uniform(k_wh, (hidden_size, fan_in),
                               minval=-bound, maxval=bound, dtype=jnp.float32)
    b_i2h = jax.random.uniform(k_bh, (hidden_size,),
                               minval=-bound, maxval=bound, dtype=jnp.float32)
    w_i2o = jax.random.uniform(k_wo, (output_size, fan_in),
                               minval=-bound, maxval=bound, dtype=jnp.float32)
    b_i2o = jax.random.uniform(k_bo, (output_size,),
                               minval=-bound, maxval=bound, dtype=jnp.float32)

    # One-time parameter prep (fused / transposed / padded).  param_dtype=bf16
    # halves weight traffic on v5e/v6e/v7x; f32 here for the tolerance check.
    params = prepare_params(w_i2h, b_i2h, w_i2o, b_i2o, input_size)

    # --- single cell step (matches RNN.forward semantics) ---
    log_probs, new_hidden = rnn_forward(x, h0, params)

    # --- full sequence: hoisted x-projection + in-kernel time loop ---
    log_probs_seq, h_T = rnn_forward_sequence(x_seq, h0, params)

    jax.block_until_ready((log_probs, new_hidden, log_probs_seq, h_T))

    # Pure-JAX reference.
    def ref_step(h, xt):
        combined = jnp.concatenate([xt, h], axis=1)
        h_new = combined @ w_i2h.T + b_i2h
        logits = combined @ w_i2o.T + b_i2o
        return h_new, jax.nn.log_softmax(logits, axis=1)

    ref_h, ref_lp = ref_step(h0, x)
    assert jnp.allclose(new_hidden, ref_h, atol=1e-4, rtol=1e-4)
    assert jnp.allclose(log_probs, ref_lp, atol=1e-4, rtol=1e-4)

    h_r = h0
    ref_lps = []
    for t in range(seq_len):
        h_r, lp = ref_step(h_r, x_seq[t])
        ref_lps.append(lp)
    ref_lps = jnp.stack(ref_lps)
    assert jnp.allclose(log_probs_seq, ref_lps, atol=1e-4, rtol=1e-4)
    assert jnp.allclose(h_T, h_r, atol=1e-4, rtol=1e-4)

    print("KERNEL_OK")
</pallas_src>

<mosaic_0001>
module attributes {stable_mosaic.version = 11 : i64} {
  func.func @_rnn_seq_kernel(%arg0: i32, %arg1: memref<8x16xf32, #tpu.memory_space<vmem>>, %arg2: memref<8x128xf32, #tpu.memory_space<vmem>>, %arg3: memref<16x128xf32, #tpu.memory_space<vmem>>, %arg4: memref<128x128xf32, #tpu.memory_space<vmem>>, %arg5: memref<1x128xf32, #tpu.memory_space<vmem>>, %arg6: memref<8x128xf32, #tpu.memory_space<vmem>>, %arg7: memref<8x128xf32, #tpu.memory_space<vmem>>) attributes {dimension_semantics = [#tpu.dimension_semantics<arbitrary>], iteration_bounds = array<i64: 1>, scalar_prefetch = 0 : i64, scratch_operands = 1 : i64, tpu.core_type = #tpu.core_type<tc>, window_params = [{transform_indices = @transform_0, window_bounds = array<i64: 8, 16>}, {pipeline_mode = #tpu.pipeline_mode<synchronous>, transform_indices = @transform_1, window_bounds = array<i64: 8, 128>}, {pipeline_mode = #tpu.pipeline_mode<synchronous>, transform_indices = @transform_2, window_bounds = array<i64: 16, 128>}, {pipeline_mode = #tpu.pipeline_mode<synchronous>, transform_indices = @transform_3, window_bounds = array<i64: 128, 128>}, {pipeline_mode = #tpu.pipeline_mode<synchronous>, transform_indices = @transform_4, window_bounds = array<i64: 1, 128>}, {transform_indices = @transform_5, window_bounds = array<i64: 8, 128>}]} {
    %c0_i32 = arith.constant 0 : i32
    %0 = arith.cmpi eq, %arg0, %c0_i32 : i32
    %1 = arith.extui %0 : i1 to i32
    %c0_i32_0 = arith.constant 0 : i32
    %2 = arith.cmpi ne, %1, %c0_i32_0 : i32
    scf.if %2 {
      %c0_23 = arith.constant 0 : index
      %c0_24 = arith.constant 0 : index
      %44 = vector.load %arg2[%c0_23, %c0_24] : memref<8x128xf32, #tpu.memory_space<vmem>>, vector<8x128xf32>
      %c0_25 = arith.constant 0 : index
      %c0_26 = arith.constant 0 : index
      %45 = vector.load %arg7[%c0_25, %c0_26] : memref<8x128xf32, #tpu.memory_space<vmem>>, vector<8x128xf32>
      tpu.vector_store %arg7[%c0_25, %c0_26], %44 {strides = array<i32>} : memref<8x128xf32, #tpu.memory_space<vmem>>, vector<8x128xf32>,
    } else {
    }
    %c0 = arith.constant 0 : index
    %c0_1 = arith.constant 0 : index
    %3 = vector.load %arg3[%c0, %c0_1] : memref<16x128xf32, #tpu.memory_space<vmem>>, vector<16x128xf32>
    %c0_2 = arith.constant 0 : index
    %c0_3 = arith.constant 0 : index
    %4 = vector.load %arg1[%c0_2, %c0_3] : memref<8x16xf32, #tpu.memory_space<vmem>>, vector<8x16xf32>
    %cst = arith.constant dense<0.000000e+00> : vector<8x128xf32>
    %5 = tpu.matmul %4, %3, %cst {dimension_numbers = #tpu.dot_dimension_numbers<[1], [0], [0], [1], [0, 0, 1, 1], [], []>} : vector<8x16xf32>, vector<16x128xf32>, vector<8x128xf32> -> vector<8x128xf32>
    %c0_4 = arith.constant 0 : index
    %c0_5 = arith.constant 0 : index
    %6 = vector.load %arg5[%c0_4, %c0_5] : memref<1x128xf32, #tpu.memory_space<vmem>>, vector<1x128xf32>
    %7 = vector.broadcast %6 : vector<1x128xf32> to vector<8x128xf32>
    %8 = arith.addf %5, %7 : vector<8x128xf32>
    %c0_6 = arith.constant 0 : index
    %c0_7 = arith.constant 0 : index
    %9 = vector.load %arg6[%c0_6, %c0_7] : memref<8x128xf32, #tpu.memory_space<vmem>>, vector<8x128xf32>
    tpu.vector_store %arg6[%c0_6, %c0_7], %8 {strides = array<i32>} : memref<8x128xf32, #tpu.memory_space<vmem>>, vector<8x128xf32>,
    %c0_8 = arith.constant 0 : index
    %c0_9 = arith.constant 0 : index
    %10 = vector.load %arg4[%c0_8, %c0_9] : memref<128x128xf32, #tpu.memory_space<vmem>>, vector<128x128xf32>
    %11 = tpu.iota {dimensions = array<i32: 1>} : vector<8x128xi32>
    %c32_i32 = arith.constant 32 : i32
    %12 = vector.broadcast %c32_i32 : i32 to vector<8x128xi32>
    %13 = arith.cmpi sge, %11, %12 : vector<8x128xi32>
    %c40_i32 = arith.constant 40 : i32
    %14 = vector.broadcast %c40_i32 : i32 to vector<8x128xi32>
    %15 = arith.cmpi slt, %11, %14 : vector<8x128xi32>
    %16 = arith.andi %13, %15 : vector<8x128xi1>
    %c32_i32_10 = arith.constant 32 : i32
    %17 = vector.broadcast %c32_i32_10 : i32 to vector<8x128xi32>
    %18 = arith.cmpi slt, %11, %17 : vector<8x128xi32>
    %c0_11 = arith.constant 0 : index
    %c0_12 = arith.constant 0 : index
    %19 = vector.load %arg7[%c0_11, %c0_12] : memref<8x128xf32, #tpu.memory_space<vmem>>, vector<8x128xf32>
    %c0_i32_13 = arith.constant 0 : i32
    %c8_i32 = arith.constant 8 : i32
    %20 = arith.muli %c0_i32_13, %c8_i32 : i32
    %21 = tpu.assume_multiple %20, 8 : i32
    %cst_14 = arith.constant dense<0.000000e+00> : vector<8x128xf32>
    %22 = tpu.matmul %19, %10, %cst_14 {dimension_numbers = #tpu.dot_dimension_numbers<[1], [0], [0], [1], [0, 0, 1, 1], [], []>} : vector<8x128xf32>, vector<128x128xf32>, vector<8x128xf32> -> vector<8x128xf32>
    %23 = arith.index_cast %21 : i32 to index
    %c0_15 = arith.constant 0 : index
    %24 = vector.load %arg6[%23, %c0_15] : memref<8x128xf32, #tpu.memory_space<vmem>>, vector<8x128xf32>
    %25 = arith.addf %22, %24 : vector<8x128xf32>
    %cst_16 = arith.constant 0xFF800000 : f32
    %26 = vector.broadcast %cst_16 : f32 to vector<8x128xf32>
    %27 = arith.select %16, %25, %26 : vector<8x128xi1>, vector<8x128xf32>
    %cst_17 = arith.constant dense<0xFF800000> : vector<8xf32>
    %28 = vector.multi_reduction <maximumf>, %27, %cst_17 [1] : vector<8x128xf32> to vector<8xf32>
    %29 = vector.shape_cast %28 : vector<8xf32> to vector<8x1xf32>
    %30 = vector.broadcast %29 : vector<8x1xf32> to vector<8x128xf32>
    %31 = arith.subf %27, %30 : vector<8x128xf32>
    %32 = math.exp %31 : vector<8x128xf32>
    %cst_18 = arith.constant dense<0.000000e+00> : vector<8xf32>
    %33 = vector.multi_reduction <add>, %32, %cst_18 [1] : vector<8x128xf32> to vector<8xf32>
    %34 = vector.shape_cast %33 : vector<8xf32> to vector<8x1xf32>
    %35 = math.log %34 : vector<8x1xf32>
    %36 = vector.broadcast %35 : vector<8x1xf32> to vector<8x128xf32>
    %37 = arith.subf %31, %36 : vector<8x128xf32>
    %cst_19 = arith.constant 0.000000e+00 : f32
    %38 = vector.broadcast %cst_19 : f32 to vector<8x128xf32>
    %39 = arith.select %18, %25, %38 : vector<8x128xi1>, vector<8x128xf32>
    %40 = arith.select %16, %37, %39 : vector<8x128xi1>, vector<8x128xf32>
    %41 = arith.index_cast %21 : i32 to index
    %c0_20 = arith.constant 0 : index
    %42 = vector.load %arg6[%41, %c0_20] : memref<8x128xf32, #tpu.memory_space<vmem>>, vector<8x128xf32>
    tpu.vector_store %arg6[%41, %c0_20], %40 {strides = array<i32>} : memref<8x128xf32, #tpu.memory_space<vmem>>, vector<8x128xf32>,
    %c1_i32 = arith.constant 1 : i32
    %c0_21 = arith.constant 0 : index
    %c0_22 = arith.constant 0 : index
    %43 = vector.load %arg7[%c0_21, %c0_22] : memref<8x128xf32, #tpu.memory_space<vmem>>, vector<8x128xf32>
    tpu.vector_store %arg7[%c0_21, %c0_22], %40 {strides = array<i32>} : memref<8x128xf32, #tpu.memory_space<vmem>>, vector<8x128xf32>,
    return
  }
  func.func @transform_0(%arg0: i32) -> (i32, i32) {
    %c0_i32 = arith.constant 0 : i32
    %c0_i32_0 = arith.constant 0 : i32
    return %arg0, %c0_i32 : i32, i32
  }
  func.func @transform_1(%arg0: i32) -> (i32, i32) {
    %c0_i32 = arith.constant 0 : i32
    %c0_i32_0 = arith.constant 0 : i32
    %c0_i32_1 = arith.constant 0 : i32
    return %c0_i32, %c0_i32_0 : i32, i32
  }
  func.func @transform_2(%arg0: i32) -> (i32, i32) {
    %c0_i32 = arith.constant 0 : i32
    %c0_i32_0 = arith.constant 0 : i32
    %c0_i32_1 = arith.constant 0 : i32
    return %c0_i32, %c0_i32_0 : i32, i32
  }
  func.func @transform_3(%arg0: i32) -> (i32, i32) {
    %c0_i32 = arith.constant 0 : i32
    %c0_i32_0 = arith.constant 0 : i32
    %c0_i32_1 = arith.constant 0 : i32
    return %c0_i32, %c0_i32_0 : i32, i32
  }
  func.func @transform_4(%arg0: i32) -> (i32, i32) {
    %c0_i32 = arith.constant 0 : i32
    %c0_i32_0 = arith.constant 0 : i32
    %c0_i32_1 = arith.constant 0 : i32
    return %c0_i32, %c0_i32_0 : i32, i32
  }
  func.func @transform_5(%arg0: i32) -> (i32, i32) {
    %c0_i32 = arith.constant 0 : i32
    %c0_i32_0 = arith.constant 0 : i32
    return %arg0, %c0_i32 : i32, i32
  }
}

</mosaic_0001>

<llo_original>
// kernel: tpu_custom_call.1
$region0: #{tpu_custom_call.1}
  #allocation0 [shape = 'u32[]', space=smem, size = 0x4, offset = 0x4, fixed_abs, tag = 'smem constant byte address 0x4 - core index']
  #allocation1 [shape = 'u32[144,128]{1,0:T(1,128)}', space=vmem, size = 0x12000, scoped, tag = 'internal scratch']
  #allocation2 [shape = 'f32[8,128]{1,0:T(8,128)}', space=vmem, size = 0x1000, scoped, tag = 'scratch operand']
  %s0 = inlined_call_operand.hbm [shape: f32[8,16], index: 0, kind: input, shape index: {}]
  %s1 = inlined_call_operand.hbm [shape: f32[8,128], index: 1, kind: input, shape index: {}]
  %s2 = inlined_call_operand.hbm [shape: f32[16,128], index: 2, kind: input, shape index: {}]
  %s3 = inlined_call_operand.hbm [shape: f32[128,128], index: 3, kind: input, shape index: {}]
  %s4 = inlined_call_operand.vmem [shape: f32[1,128], index: 4, kind: input, shape index: {}]
  %s5 = inlined_call_operand.hbm [shape: f32[8,128], index: 5, kind: output, shape index: {}]
  %s6 = sld [smem:[#allocation0]]
  $region50: #{tpu_custom_call.1} parent=0
    _
  %s8 = ssub.s32 1, %s6
  %s9 = scalar_select 0, %s8, %s6
  $region1: #{tpu_custom_call.1} parent=0
    #allocation3 [shape = 'u8[4096]{0}', space=vmem, size = 0x1000, scoped, tag = 'input window, operand 0, single buffered']
    #allocation4 [shape = 's32[1]{0}', space=sflag, size = 0x4, scoped, tag = 'scoped memory for tpu_custom_call.1']
    #allocation5 [shape = 's32[1]{0}', space=sflag, size = 0x4, scoped, tag = 'scoped memory for tpu_custom_call.1']
    #allocation6 [shape = 'u8[4096]{0}', space=vmem, size = 0x1000, scoped, tag = 'input window, operand 1, single buffered']
    #allocation7 [shape = 's32[1]{0}', space=sflag, size = 0x4, scoped, tag = 'scoped memory for tpu_custom_call.1']
    #allocation8 [shape = 'u8[8192]{0}', space=vmem, size = 0x2000, scoped, tag = 'input window, operand 2, single buffered']
    #allocation9 [shape = 'u8[65536]{0}', space=vmem, size = 0x10000, scoped, tag = 'input window, operand 3, single buffered']
    #allocation10 [shape = 's32[1]{0}', space=sflag, size = 0x4, scoped, tag = 'scoped memory for tpu_custom_call.1']
    #allocation11 [shape = 'u8[4096]{0}', space=vmem, size = 0x1000, scoped, tag = 'output window, operand 0, single buffered']
    %10 = vsyncpa [#allocation4], 0
    %11 = vsyncpa [#allocation7], 0
    %12 = vsyncpa [#allocation10], 0
    %13 = vsyncpa [#allocation5], 0
    // Predicated region
    $region2: #{tpu_custom_call.1} parent=1 // pred_check
      _
    $region3: #{tpu_custom_call.1} parent=1 // pred_check_branch
      %15 = sbr.rel (0) target = $region5
    $region4: #{tpu_custom_call.1} parent=1 // pred_region
      %s17 = ssub.s32 128, 128
      %18 = vsyncadd [#allocation4], %s17
      %s20 = sshll.u32 [#allocation3], 4
      %s21 = int_to_ptr.vmem [resolvable:$true] %s20
      %23 = dma.hbm_to_vmem [thread:$0]  %s0, 128, %s21, [#allocation4]
    $region5: #{tpu_custom_call.1} parent=1 // pred_fallthru
      _
    // Predicated region
    $region6: #{tpu_custom_call.1} parent=1 // pred_check
      _
    $region7: #{tpu_custom_call.1} parent=1 // pred_check_branch
      %25 = sbr.rel (0) target = $region9
    $region8: #{tpu_custom_call.1} parent=1 // pred_region
      %s27 = ssub.s32 128, 128
      %28 = vsyncadd [#allocation7], %s27
      %s30 = sshll.u32 [#allocation6], 4
      %s31 = int_to_ptr.vmem [resolvable:$true] %s30
      %33 = dma.hbm_to_vmem [thread:$0]  %s1, 128, %s31, [#allocation7]
    $region9: #{tpu_custom_call.1} parent=1 // pred_fallthru
      _
    // Predicated region
    $region10: #{tpu_custom_call.1} parent=1 // pred_check
      _
    $region11: #{tpu_custom_call.1} parent=1 // pred_check_branch
      %35 = sbr.rel (0) target = $region13
    $region12: #{tpu_custom_call.1} parent=1 // pred_region
      %s37 = ssub.s32 256, 256
      %38 = vsyncadd [#allocation7], %s37
      %s39 = sshll.u32 [#allocation8], 4
      %s40 = int_to_ptr.vmem [resolvable:$true] %s39
      %45 = dma.hbm_to_vmem [thread:$0]  %s2, 256, %s40, [#allocation7], 128, 128, 8
    $region13: #{tpu_custom_call.1} parent=1 // pred_fallthru
      _
    // Predicated region
    $region14: #{tpu_custom_call.1} parent=1 // pred_check
      _
    $region15: #{tpu_custom_call.1} parent=1 // pred_check_branch
      %47 = sbr.rel (0) target = $region17
    $region16: #{tpu_custom_call.1} parent=1 // pred_region
      %s49 = ssub.s32 2048, 2048
      %50 = vsyncadd [#allocation10], %s49
      %s51 = sshll.u32 [#allocation9], 4
      %s52 = int_to_ptr.vmem [resolvable:$true] %s51
      %57 = dma.hbm_to_vmem [thread:$0]  %s3, 2048, %s52, [#allocation10], 128, 128, 8
    $region17: #{tpu_custom_call.1} parent=1 // pred_fallthru
      _
    // Predicated region
    $region18: #{tpu_custom_call.1} parent=1 // pred_check
      _
    $region19: #{tpu_custom_call.1} parent=1 // pred_check_branch
      %59 = sbr.rel (0) target = $region21
    $region20: #{tpu_custom_call.1} parent=1 // pred_region
      _
    $region21: #{tpu_custom_call.1} parent=1 // pred_fallthru
      _
    // Predicated region
    $region22: #{tpu_custom_call.1} parent=1 // pred_check
      _
    $region23: #{tpu_custom_call.1} parent=1 // pred_check_branch
      %61 = sbr.rel (0) target = $region25
    $region24: #{tpu_custom_call.1} parent=1 // pred_region
      %62 = dma.done [#allocation4], 128
    $region25: #{tpu_custom_call.1} parent=1 // pred_fallthru
      _
    // Predicated region
    $region26: #{tpu_custom_call.1} parent=1 // pred_check
      _
    $region27: #{tpu_custom_call.1} parent=1 // pred_check_branch
      %64 = sbr.rel (0) target = $region29
    $region28: #{tpu_custom_call.1} parent=1 // pred_region
      %65 = dma.done [#allocation7], 128
    $region29: #{tpu_custom_call.1} parent=1 // pred_fallthru
      _
    // Predicated region
    $region30: #{tpu_custom_call.1} parent=1 // pred_check
      _
    $region31: #{tpu_custom_call.1} parent=1 // pred_check_branch
      %67 = sbr.rel (0) target = $region33
    $region32: #{tpu_custom_call.1} parent=1 // pred_region
      %68 = dma.done [#allocation7], 256
    $region33: #{tpu_custom_call.1} parent=1 // pred_fallthru
      _
    // Predicated region
    $region34: #{tpu_custom_call.1} parent=1 // pred_check
      _
    $region35: #{tpu_custom_call.1} parent=1 // pred_check_branch
      %70 = sbr.rel (0) target = $region37
    $region36: #{tpu_custom_call.1} parent=1 // pred_region
      %71 = dma.done [#allocation10], 2048
    $region37: #{tpu_custom_call.1} parent=1 // pred_fallthru
      _
    %p72 = scmp.eq.s32.totalorder 0, 0
    // Predicated region
    $region38: #{tpu_custom_call.1} parent=1 // pred_check
      %p73 = pneg %p72
    $region39: #{tpu_custom_call.1} parent=1 // pred_check_branch
      %75 = sbr.rel (%p73) target = $region41
    $region40: #{tpu_custom_call.1} parent=1 // pred_region
      %v76 = vld [vmem:[#allocation6] sm:$0xff]
      %77 = vst [vmem:[#allocation2] sm:$0xff] %v76
    $region41: #{tpu_custom_call.1} parent=1 // pred_fallthru
      _
    %v78 = vld [vmem:[#allocation8] sm:$0xff]
    %v79 = vld [vmem:[#allocation8 + $0x8] sm:$0xff]
    %v80 = vld [vmem:[#allocation3] sm:$0xff]
    %v81 = vld [vmem:[%s4] sm:$0x1]
    %v83 = vlaneseq
    %v84 = vshrl.u32 %v83, 7
    %v85 = vsub.s32 0, %v84
    %v86 = vrot.slane %v81, %v85
    %vm88 = vcmask 130048
    %v90 = vsel %vm88, %v80, 0
    %92 = vmatprep.subr.mxu0 0.0
    %93 = vmatpush1.msra.mxu0 %v78
    %94 = vmatprep.subr.mxu0 0.0
    %95 = vmatpush1.msra.mxu0 %v79
    %96 = vmatprep.subr.mxu0 0.0
    %97 = vmatpush1.msra.mxu0 0.0
    %98 = vmatprep.subr.mxu0 0.0
    %99 = vmatpush1.msra.mxu0 0.0
    %100 = vmatprep.subr.mxu0 0.0
    %101 = vmatpush1.msra.mxu0 0.0
    %102 = vmatprep.subr.mxu0 0.0
    %103 = vmatpush1.msra.mxu0 0.0
    %104 = vmatprep.subr.mxu0 0.0
    %105 = vmatpush1.msra.mxu0 0.0
    %106 = vmatprep.subr.mxu0 0.0
    %107 = vmatpush1.msra.mxu0 0.0
    %108 = vmatprep.subr.mxu0 0.0
    %109 = vmatpush1.msra.mxu0 0.0
    %110 = vmatprep.subr.mxu0 0.0
    %111 = vmatpush1.msra.mxu0 0.0
    %112 = vmatprep.subr.mxu0 0.0
    %113 = vmatpush1.msra.mxu0 0.0
    %114 = vmatprep.subr.mxu0 0.0
    %115 = vmatpush1.msra.mxu0 0.0
    %116 = vmatprep.subr.mxu0 0.0
    %117 = vmatpush1.msra.mxu0 0.0
    %118 = vmatprep.subr.mxu0 0.0
    %119 = vmatpush1.msra.mxu0 0.0
    %120 = vmatprep.subr.mxu0 0.0
    %121 = vmatpush1.msra.mxu0 0.0
    %122 = vmatprep.subr.mxu0 0.0
    %123 = vmatpush1.msra.mxu0 0.0
    %124 = vmatprep.subr.mxu0 0.0
    %125 = vmatpush1.msra.mxu0 0.0
    %126 = vmatprep.subr.mxu0 0.0
    %127 = vmatpush1.msra.mxu0 0.0
    %128 = vmatprep.subr.mxu0 0.0
    %129 = vmatpush1.msra.mxu0 0.0
    %130 = vmatprep.subr.mxu0 0.0
    %131 = vmatpush1.msra.mxu0 0.0
    %132 = vmatprep.subr.mxu0 0.0
    %133 = vmatpush1.msra.mxu0 0.0
    %134 = vmatprep.subr.mxu0 0.0
    %135 = vmatpush1.msra.mxu0 0.0
    %136 = vmatprep.subr.mxu0 0.0
    %137 = vmatpush1.msra.mxu0 0.0
    %138 = vmatprep.subr.mxu0 0.0
    %139 = vmatpush1.msra.mxu0 0.0
    %140 = vmatprep.subr.mxu0 0.0
    %141 = vmatpush1.msra.mxu0 0.0
    %142 = vmatprep.subr.mxu0 0.0
    %143 = vmatpush1.msra.mxu0 0.0
    %144 = vmatprep.subr.mxu0 0.0
    %145 = vmatpush1.msra.mxu0 0.0
    %146 = vmatprep.subr.mxu0 0.0
    %147 = vmatpush1.msra.mxu0 0.0
    %148 = vmatprep.subr.mxu0 0.0
    %149 = vmatpush1.msra.mxu0 0.0
    %150 = vmatprep.subr.mxu0 0.0
    %151 = vmatpush1.msra.mxu0 0.0
    %152 = vmatprep.subr.mxu0 0.0
    %153 = vmatpush1.msra.mxu0 0.0
    %154 = vmatprep.subr.mxu0 0.0
    %155 = vmatpush1.msra.mxu0 0.0
    %156 = vmatprep.mubr.f32.mxu0 0.0
    %157 = vmatmul.mubr.f32.gmra.mrb[0].mxu0 %v90
    %v158 = vpop.f32.mrb[0].mxu0
    %v159 = vadd.f32 %v86, %v158
    %v160 = vpop.f32.mrb[0].mxu0
    %161 = vdwg.mxu0
    %162 = vst [vmem:[#allocation11] sm:$0xff] %v159
    %v163 = vld [vmem:[#allocation9] sm:$0xff]
    %v164 = vld [vmem:[#allocation9 + $0x8] sm:$0xff]
    %v165 = vld [vmem:[#allocation9 + $0x10] sm:$0xff]
    %v166 = vld [vmem:[#allocation9 + $0x18] sm:$0xff]
    %v167 = vld [vmem:[#allocation9 + $0x20] sm:$0xff]
    %v168 = vld [vmem:[#allocation9 + $0x28] sm:$0xff]
    %v169 = vld [vmem:[#allocation9 + $0x30] sm:$0xff]
    %v170 = vld [vmem:[#allocation9 + $0x38] sm:$0xff]
    %v171 = vld [vmem:[#allocation9 + $0x40] sm:$0xff]
    %v172 = vld [vmem:[#allocation9 + $0x48] sm:$0xff]
    %v173 = vld [vmem:[#allocation9 + $0x50] sm:$0xff]
    %v174 = vld [vmem:[#allocation9 + $0x58] sm:$0xff]
    %v175 = vld [vmem:[#allocation9 + $0x60] sm:$0xff]
    %v176 = vld [vmem:[#allocation9 + $0x68] sm:$0xff]
    %v177 = vld [vmem:[#allocation9 + $0x70] sm:$0xff]
    %v178 = vld [vmem:[#allocation9 + $0x78] sm:$0xff]
    %v179 = vlaneseq
    %v180 = vand.u32 %v179, 127
    %vm181 = vcmp.ge.s32.totalorder %v180, 32
    %vm182 = vcmp.lt.s32.totalorder %v180, 40
    %vm183 = vmand %vm181, %vm182
    %vm184 = vcmp.lt.s32.totalorder %v180, 32
    %v185 = vld [vmem:[#allocation2] sm:$0xff]
    %v186 = vld [vmem:[#allocation11] sm:$0xff]
    %187 = vmatprep.subr.mxu0 0.0
    %188 = vmatpush1.msra.mxu0 %v163
    %189 = vmatprep.subr.mxu0 0.0
    %190 = vmatpush1.msra.mxu0 %v164
    %191 = vmatprep.subr.mxu0 0.0
    %192 = vmatpush1.msra.mxu0 %v165
    %193 = vmatprep.subr.mxu0 0.0
    %194 = vmatpush1.msra.mxu0 %v166
    %195 = vmatprep.subr.mxu0 0.0
    %196 = vmatpush1.msra.mxu0 %v167
    %197 = vmatprep.subr.mxu0 0.0
    %198 = vmatpush1.msra.mxu0 %v168
    %199 = vmatprep.subr.mxu0 0.0
    %200 = vmatpush1.msra.mxu0 %v169
    %201 = vmatprep.subr.mxu0 0.0
    %202 = vmatpush1.msra.mxu0 %v170
    %203 = vmatprep.subr.mxu0 0.0
    %204 = vmatpush1.msra.mxu0 %v171
    %205 = vmatprep.subr.mxu0 0.0
    %206 = vmatpush1.msra.mxu0 %v172
    %207 = vmatprep.subr.mxu0 0.0
    %208 = vmatpush1.msra.mxu0 %v173
    %209 = vmatprep.subr.mxu0 0.0
    %210 = vmatpush1.msra.mxu0 %v174
    %211 = vmatprep.subr.mxu0 0.0
    %212 = vmatpush1.msra.mxu0 %v175
    %213 = vmatprep.subr.mxu0 0.0
    %214 = vmatpush1.msra.mxu0 %v176
    %215 = vmatprep.subr.mxu0 0.0
    %216 = vmatpush1.msra.mxu0 %v177
    %217 = vmatprep.subr.mxu0 0.0
    %218 = vmatpush1.msra.mxu0 %v178
    %219 = vmatprep.subr.mxu0 0.0
    %220 = vmatpush1.msra.mxu0 0.0
    %221 = vmatprep.subr.mxu0 0.0
    %222 = vmatpush1.msra.mxu0 0.0
    %223 = vmatprep.subr.mxu0 0.0
    %224 = vmatpush1.msra.mxu0 0.0
    %225 = vmatprep.subr.mxu0 0.0
    %226 = vmatpush1.msra.mxu0 0.0
    %227 = vmatprep.subr.mxu0 0.0
    %228 = vmatpush1.msra.mxu0 0.0
    %229 = vmatprep.subr.mxu0 0.0
    %230 = vmatpush1.msra.mxu0 0.0
    %231 = vmatprep.subr.mxu0 0.0
    %232 = vmatpush1.msra.mxu0 0.0
    %233 = vmatprep.subr.mxu0 0.0
    %234 = vmatpush1.msra.mxu0 0.0
    %235 = vmatprep.subr.mxu0 0.0
    %236 = vmatpush1.msra.mxu0 0.0
    %237 = vmatprep.subr.mxu0 0.0
    %238 = vmatpush1.msra.mxu0 0.0
    %239 = vmatprep.subr.mxu0 0.0
    %240 = vmatpush1.msra.mxu0 0.0
    %241 = vmatprep.subr.mxu0 0.0
    %242 = vmatpush1.msra.mxu0 0.0
    %243 = vmatprep.subr.mxu0 0.0
    %244 = vmatpush1.msra.mxu0 0.0
    %245 = vmatprep.subr.mxu0 0.0
    %246 = vmatpush1.msra.mxu0 0.0
    %247 = vmatprep.subr.mxu0 0.0
    %248 = vmatpush1.msra.mxu0 0.0
    %249 = vmatprep.subr.mxu0 0.0
    %250 = vmatpush1.msra.mxu0 0.0
    %251 = vmatprep.mubr.f32.mxu0 0.0
    %252 = vmatmul.mubr.f32.gmra.mrb[0].mxu0 %v185
    %v253 = vpop.f32.mrb[0].mxu0
    %v254 = vadd.f32 %v186, %v253
    %v255 = vpop.f32.mrb[0].mxu0
    %256 = vdwg.mxu0
    %v257 = vsel %vm183, %v254, -inf
    %258 = vmax.xlane.f32.xlu0 %v257
    %v259 = vpop.xlane.xlu0 %258
    %v260 = vsub.f32 %v257, %v259
    %v261 = vmul.f32 %v260, 1.442695
    %v262 = vpow.pop %v261
    %263 = vadd.xlane.f32.xlu0 %v262
    %v264 = vpop.xlane.xlu0 %263
    %v265 = vlog2.pop %v264
    %v266 = vmul.f32 %v265, 0.6931472
    %v267 = vsub.f32 %v260, %v266
    %v268 = vsel %vm184, %v254, 0.0
    %v269 = vsel %vm183, %v267, %v268
    %270 = vst [vmem:[#allocation11] sm:$0xff] %v269
    %271 = vst [vmem:[#allocation2] sm:$0xff] %v269
    // Predicated region
    $region42: #{tpu_custom_call.1} parent=1 // pred_check
      _
    $region43: #{tpu_custom_call.1} parent=1 // pred_check_branch
      %273 = sbr.rel (0) target = $region45
    $region44: #{tpu_custom_call.1} parent=1 // pred_region
      %s275 = ssub.s32 128, 128
      %276 = vsyncadd [#allocation5], %s275
      %s278 = sshll.u32 [#allocation11], 4
      %s279 = int_to_ptr.vmem [resolvable:$true] %s278
      %281 = dma.vmem_to_hbm [thread:$0]  %s279, 128, %s5, [#allocation5]
    $region45: #{tpu_custom_call.1} parent=1 // pred_fallthru
      _
    // Predicated region
    $region46: #{tpu_custom_call.1} parent=1 // pred_check
      _
    $region47: #{tpu_custom_call.1} parent=1 // pred_check_branch
      %283 = sbr.rel (0) target = $region49
    $region48: #{tpu_custom_call.1} parent=1 // pred_region
      %284 = dma.done [#allocation5], 128
    $region49: #{tpu_custom_call.1} parent=1 // pred_fallthru
      _
    %285 = vsyncpa [#allocation4], 1
    %286 = vsyncpa [#allocation7], 1
    %287 = vsyncpa [#allocation10], 1
    %288 = vsyncpa [#allocation5], 1

</llo_original>
